<compile_context>
chip_gen: v6e
topology: v6e:2x2x1
jax: 0.10.0
libtpu: 0.0.40
codegen_flags: <defaults>
</compile_context>

<pallas_src>
import functools

import jax
import jax.numpy as jnp
from jax.experimental import pallas as pl
from jax.experimental.pallas import tpu as pltpu

N_PAD = 128  # one lane-width tile
# TODO(synk): lift the n <= 128 cap with a tiled (TQ, TC) grid + resident accumulators, and
#             batch multiple loss instances per pallas_call (leading "parallel" grid axis).


def _ecl_kernel(rows_ref, cols_ref, out_ref, *, n, event_weight, censored_weight):
    # rows_ref: (8, N_PAD) f32, rows = [preds, durations, events, 0...]  (lane-varying, index c)
    # cols_ref: (N_PAD, 8) f32, cols = [preds, durations, events, 0...]  (sublane-varying, index r)
    p_c = rows_ref[0:1, :]          # (1, N)  preds[c]
    d_c = rows_ref[1:2, :]          # (1, N)  durations[c]
    e_c = rows_ref[2:3, :]          # (1, N)  events[c]
    p_r = cols_ref[:, 0:1]          # (N, 1)  preds[r]
    d_r = cols_ref[:, 1:2]          # (N, 1)  durations[r]
    e_r = cols_ref[:, 2:3]          # (N, 1)  events[r]

    # Center predictions by the max of the real (unpadded) entries; exp(p-m) <= 1 and
    # exp(m-p) only overflows when the reference exp(p[r]-p[c]) would overflow too.
    lane = jax.lax.broadcasted_iota(jnp.int32, (1, N_PAD), 1)
    m = jnp.max(jnp.where(lane < n, p_c, -jnp.inf), axis=-1, keepdims=True)   # (1, 1)

    w_c = jnp.where(e_c == 1.0, event_weight, censored_weight)   # (1, N)
    w_r = jnp.where(e_r == 1.0, event_weight, censored_weight)   # (N, 1)
    ind_c = jnp.where(e_c == 1.0, 1.0, 0.0)                      # (1, N) event indicator

    # Separable factors (2*N exps total). Pad columns have events==0 -> a_c = 0;
    # pad rows have durations == -inf -> never "valid" below.
    a_c = jnp.where(e_c == 1.0, jnp.exp(m - p_c) * w_c, 0.0)     # (1, N): exp(-(p[c]-m))*w[c]*[e[c]==1]
    b_r = jnp.exp(p_r - m) * w_r                                 # (N, 1): exp(p[r]-m)*w[r]

    valid = d_c < d_r                                            # (N, N): durations[c] < durations[r]
    loss_mat = jnp.where(valid, a_c * b_r, 0.0)                  # (N, N) select, no mask multiply
    cnt_mat = jnp.where(valid, ind_c, 0.0)                       # (N, N)

    out_ref[0] = jnp.sum(loss_mat)
    out_ref[1] = jnp.sum(cnt_mat)


def exponential_concordance_loss(preds, targets, event_weight=1.0,
                                 censored_weight=1.0):
    """preds: (n,), targets: (n, 2) with [:,0]=durations, [:,1]=events."""
    preds = preds.reshape(-1).astype(jnp.float32)
    durations = targets[:, 0].reshape(-1).astype(jnp.float32)
    events = targets[:, 1].reshape(-1).astype(jnp.float32)
    n = preds.shape[0]
    assert n <= N_PAD, "this single-tile kernel supports n <= 128"

    pad = N_PAD - n
    preds_p = jnp.pad(preds, (0, pad))                               # pad value irrelevant (masked)
    dur_p = jnp.pad(durations, (0, pad), constant_values=-jnp.inf)   # pad rows can never be 'valid'
    ev_p = jnp.pad(events, (0, pad))                                 # pad cols carry no event

    rows = jnp.zeros((8, N_PAD), jnp.float32)
    rows = rows.at[0].set(preds_p).at[1].set(dur_p).at[2].set(ev_p)  # (8, 128): one 4 KiB DMA
    cols = rows.T                                                    # (128, 8): sublane-major copy

    kernel = functools.partial(_ecl_kernel, n=n,
                               event_weight=float(event_weight),
                               censored_weight=float(censored_weight))

    sums = pl.pallas_call(
        kernel,
        out_shape=jax.ShapeDtypeStruct((2,), jnp.float32),
        in_specs=[pl.BlockSpec(memory_space=pltpu.VMEM),
                  pl.BlockSpec(memory_space=pltpu.VMEM)],
        out_specs=pl.BlockSpec(memory_space=pltpu.SMEM),
    )(rows, cols)

    loss_sum, num_pairs = sums[0], sums[1]
    return jnp.where(num_pairs > 0, loss_sum / num_pairs, 0.0).astype(preds.dtype)


def _reference(preds, targets, event_weight=1.0, censored_weight=1.0):
    """Plain-JAX reference mirroring the PyTorch forward."""
    durations = targets[:, 0]
    events = targets[:, 1]
    n = preds.shape[0]
    d_i = jnp.broadcast_to(durations[None, :], (n, n))
    d_j = jnp.broadcast_to(durations[:, None], (n, n))
    e_i = jnp.broadcast_to(events[None, :], (n, n))
    e_j = jnp.broadcast_to(events[:, None], (n, n))
    p_i = jnp.broadcast_to(preds[None, :], (n, n))
    p_j = jnp.broadcast_to(preds[:, None], (n, n))
    valid = d_i < d_j
    w_i = jnp.where(e_i == 1, event_weight, censored_weight)
    w_j = jnp.where(e_j == 1, event_weight, censored_weight)
    mask = (valid & (e_i == 1)).astype(jnp.float32)
    loss = jnp.sum(jnp.exp(-(p_i - p_j)) * mask * w_i * w_j)
    cnt = jnp.sum(mask)
    return jnp.where(cnt > 0, loss / cnt, 0.0)


if __name__ == "__main__":
    key = jax.random.PRNGKey(0)
    k1, k2, k3 = jax.random.split(key, 3)

    # Test 1: n = 8, mixed events, asymmetric weights.
    n = 8
    preds = jax.random.normal(k1, (n,), dtype=jnp.float32)
    durations = jax.random.uniform(k2, (n,), dtype=jnp.float32) * 10.0
    events = (jax.random.uniform(k3, (n,)) > 0.4).astype(jnp.float32)
    targets = jnp.stack([durations, events], axis=1)  # (n, 2)

    loss = exponential_concordance_loss(preds, targets,
                                        event_weight=1.0, censored_weight=0.5)
    loss = jax.block_until_ready(loss)
    ref = _reference(preds, targets, event_weight=1.0, censored_weight=0.5)
    assert jnp.allclose(loss, ref, rtol=1e-5, atol=1e-5), (loss, ref)

    # Test 2: n = 5 (exercises padding), all censored -> no valid pairs -> loss = 0.0.
    preds2 = preds[:5]
    targets2 = jnp.stack([durations[:5], jnp.zeros((5,), jnp.float32)], axis=1)
    loss2 = jax.block_until_ready(
        exponential_concordance_loss(preds2, targets2,
                                     event_weight=2.0, censored_weight=0.7))
    ref2 = _reference(preds2, targets2, event_weight=2.0, censored_weight=0.7)
    assert jnp.allclose(loss2, ref2, rtol=1e-5, atol=1e-5), (loss2, ref2)

    print("KERNEL_OK")
</pallas_src>

<mosaic_0001>
module attributes {stable_mosaic.version = 11 : i64} {
  func.func @_ecl_kernel(%arg0: memref<8x128xf32, #tpu.memory_space<vmem>>, %arg1: memref<128x8xf32, #tpu.memory_space<vmem>>, %arg2: memref<2xf32, #tpu.memory_space<smem>>) attributes {dimension_semantics = [], scalar_prefetch = 0 : i64, scratch_operands = 0 : i64, tpu.core_type = #tpu.core_type<tc>} {
    %c0 = arith.constant 0 : index
    %c0_0 = arith.constant 0 : index
    %0 = vector.load %arg0[%c0, %c0_0] : memref<8x128xf32, #tpu.memory_space<vmem>>, vector<1x128xf32>
    %c1 = arith.constant 1 : index
    %c0_1 = arith.constant 0 : index
    %1 = vector.load %arg0[%c1, %c0_1] : memref<8x128xf32, #tpu.memory_space<vmem>>, vector<1x128xf32>
    %c2 = arith.constant 2 : index
    %c0_2 = arith.constant 0 : index
    %2 = vector.load %arg0[%c2, %c0_2] : memref<8x128xf32, #tpu.memory_space<vmem>>, vector<1x128xf32>
    %c0_3 = arith.constant 0 : index
    %c0_4 = arith.constant 0 : index
    %3 = vector.load %arg1[%c0_3, %c0_4] : memref<128x8xf32, #tpu.memory_space<vmem>>, vector<128x1xf32>
    %c0_5 = arith.constant 0 : index
    %c1_6 = arith.constant 1 : index
    %4 = vector.load %arg1[%c0_5, %c1_6] : memref<128x8xf32, #tpu.memory_space<vmem>>, vector<128x1xf32>
    %c0_7 = arith.constant 0 : index
    %c2_8 = arith.constant 2 : index
    %5 = vector.load %arg1[%c0_7, %c2_8] : memref<128x8xf32, #tpu.memory_space<vmem>>, vector<128x1xf32>
    %6 = tpu.iota {dimensions = array<i32: 1>} : vector<1x128xi32>
    %c8_i32 = arith.constant 8 : i32
    %7 = vector.broadcast %c8_i32 : i32 to vector<1x128xi32>
    %8 = arith.cmpi slt, %6, %7 : vector<1x128xi32>
    %cst = arith.constant 0xFF800000 : f32
    %9 = vector.broadcast %cst : f32 to vector<1x128xf32>
    %10 = arith.select %8, %0, %9 : vector<1x128xi1>, vector<1x128xf32>
    %cst_9 = arith.constant dense<0xFF800000> : vector<1xf32>
    %11 = vector.multi_reduction <maximumf>, %10, %cst_9 [1] : vector<1x128xf32> to vector<1xf32>
    %12 = vector.shape_cast %11 : vector<1xf32> to vector<1x1xf32>
    %cst_10 = arith.constant 1.000000e+00 : f32
    %13 = vector.broadcast %cst_10 : f32 to vector<1x128xf32>
    %14 = arith.cmpf oeq, %2, %13 : vector<1x128xf32>
    %cst_11 = arith.constant 1.000000e+00 : f32
    %cst_12 = arith.constant 5.000000e-01 : f32
    %15 = vector.broadcast %cst_11 : f32 to vector<1x128xf32>
    %16 = vector.broadcast %cst_12 : f32 to vector<1x128xf32>
    %17 = arith.select %14, %15, %16 : vector<1x128xi1>, vector<1x128xf32>
    %cst_13 = arith.constant 1.000000e+00 : f32
    %18 = vector.broadcast %cst_13 : f32 to vector<128x1xf32>
    %19 = arith.cmpf oeq, %5, %18 : vector<128x1xf32>
    %cst_14 = arith.constant 1.000000e+00 : f32
    %cst_15 = arith.constant 5.000000e-01 : f32
    %20 = vector.broadcast %cst_14 : f32 to vector<128x1xf32>
    %21 = vector.broadcast %cst_15 : f32 to vector<128x1xf32>
    %22 = arith.select %19, %20, %21 : vector<128x1xi1>, vector<128x1xf32>
    %cst_16 = arith.constant 1.000000e+00 : f32
    %23 = vector.broadcast %cst_16 : f32 to vector<1x128xf32>
    %24 = arith.cmpf oeq, %2, %23 : vector<1x128xf32>
    %cst_17 = arith.constant 1.000000e+00 : f32
    %cst_18 = arith.constant 0.000000e+00 : f32
    %25 = vector.broadcast %cst_17 : f32 to vector<1x128xf32>
    %26 = vector.broadcast %cst_18 : f32 to vector<1x128xf32>
    %27 = arith.select %24, %25, %26 : vector<1x128xi1>, vector<1x128xf32>
    %cst_19 = arith.constant 1.000000e+00 : f32
    %28 = vector.broadcast %cst_19 : f32 to vector<1x128xf32>
    %29 = arith.cmpf oeq, %2, %28 : vector<1x128xf32>
    %30 = vector.broadcast %12 : vector<1x1xf32> to vector<1x128xf32>
    %31 = arith.subf %30, %0 : vector<1x128xf32>
    %32 = math.exp %31 : vector<1x128xf32>
    %33 = arith.mulf %32, %17 : vector<1x128xf32>
    %cst_20 = arith.constant 0.000000e+00 : f32
    %34 = vector.broadcast %cst_20 : f32 to vector<1x128xf32>
    %35 = arith.select %29, %33, %34 : vector<1x128xi1>, vector<1x128xf32>
    %36 = vector.broadcast %12 : vector<1x1xf32> to vector<128x1xf32>
    %37 = arith.subf %3, %36 : vector<128x1xf32>
    %38 = math.exp %37 : vector<128x1xf32>
    %39 = arith.mulf %38, %22 : vector<128x1xf32>
    %40 = vector.broadcast %1 : vector<1x128xf32> to vector<128x128xf32>
    %41 = vector.broadcast %4 : vector<128x1xf32> to vector<128x128xf32>
    %42 = arith.cmpf olt, %40, %41 : vector<128x128xf32>
    %43 = vector.broadcast %35 : vector<1x128xf32> to vector<128x128xf32>
    %44 = vector.broadcast %39 : vector<128x1xf32> to vector<128x128xf32>
    %45 = arith.mulf %43, %44 : vector<128x128xf32>
    %cst_21 = arith.constant 0.000000e+00 : f32
    %46 = vector.broadcast %cst_21 : f32 to vector<128x128xf32>
    %47 = arith.select %42, %45, %46 : vector<128x128xi1>, vector<128x128xf32>
    %cst_22 = arith.constant 0.000000e+00 : f32
    %48 = vector.shape_cast %27 : vector<1x128xf32> to vector<1x128xf32>
    %49 = vector.broadcast %48 : vector<1x128xf32> to vector<128x128xf32>
    %50 = vector.broadcast %cst_22 : f32 to vector<128x128xf32>
    %51 = arith.select %42, %49, %50 : vector<128x128xi1>, vector<128x128xf32>
    %52 = vector.shape_cast %47 : vector<128x128xf32> to vector<1x128x128xf32>
    %cst_23 = arith.constant dense<0.000000e+00> : vector<1xf32>
    %53 = vector.multi_reduction <add>, %52, %cst_23 [1, 2] : vector<1x128x128xf32> to vector<1xf32>
    %54 = vector.shape_cast %53 : vector<1xf32> to vector<1x1x1xf32>
    %55 = vector.extract %54[0, 0, 0] : f32 from vector<1x1x1xf32>
    %c0_24 = arith.constant 0 : index
    %56 = memref.load %arg2[%c0_24] : memref<2xf32, #tpu.memory_space<smem>>
    memref.store %55, %arg2[%c0_24] : memref<2xf32, #tpu.memory_space<smem>>
    %57 = vector.shape_cast %51 : vector<128x128xf32> to vector<1x128x128xf32>
    %cst_25 = arith.constant dense<0.000000e+00> : vector<1xf32>
    %58 = vector.multi_reduction <add>, %57, %cst_25 [1, 2] : vector<1x128x128xf32> to vector<1xf32>
    %59 = vector.shape_cast %58 : vector<1xf32> to vector<1x1x1xf32>
    %60 = vector.extract %59[0, 0, 0] : f32 from vector<1x1x1xf32>
    %c1_26 = arith.constant 1 : index
    %61 = memref.load %arg2[%c1_26] : memref<2xf32, #tpu.memory_space<smem>>
    memref.store %60, %arg2[%c1_26] : memref<2xf32, #tpu.memory_space<smem>>
    return
  }
}

</mosaic_0001>

<llo_original>
// kernel: tpu_custom_call.1
$region0: #{tpu_custom_call.1}
  #allocation0 [shape = 'u32[]', space=smem, size = 0x4, offset = 0x4, fixed_abs, tag = 'smem constant byte address 0x4 - core index']
  #allocation1 [shape = 'u32[144,128]{1,0:T(1,128)}', space=vmem, size = 0x12000, scoped, tag = 'internal scratch']
  %s0 = inlined_call_operand.vmem [shape: f32[8,128], index: 0, kind: input, shape index: {}]
  %s1 = inlined_call_operand.vmem [shape: f32[128,8], index: 1, kind: input, shape index: {}]
  %s2 = inlined_call_operand.hbm [shape: f32[2], index: 2, kind: output, shape index: {}]
  %s3 = sld [smem:[#allocation0]]
  $region18: #{tpu_custom_call.1} parent=0
    _
  %s5 = ssub.s32 1, %s3
  %s6 = scalar_select 0, %s5, %s3
  $region1: #{tpu_custom_call.1} parent=0
    #allocation2 [shape = 'u8[512]{0}', space=smem, size = 0x200, scoped, tag = 'output window, operand 0, single buffered']
    #allocation3 [shape = 's32[1]{0}', space=sflag, size = 0x4, scoped, tag = 'scoped memory for tpu_custom_call.1']
    %7 = vsyncpa [#allocation3], 0
    // Predicated region
    $region2: #{tpu_custom_call.1} parent=1 // pred_check
      _
    $region3: #{tpu_custom_call.1} parent=1 // pred_check_branch
      %9 = sbr.rel (0) target = $region5
    $region4: #{tpu_custom_call.1} parent=1 // pred_region
      _
    $region5: #{tpu_custom_call.1} parent=1 // pred_fallthru
      _
    // Predicated region
    $region6: #{tpu_custom_call.1} parent=1 // pred_check
      _
    $region7: #{tpu_custom_call.1} parent=1 // pred_check_branch
      %11 = sbr.rel (0) target = $region9
    $region8: #{tpu_custom_call.1} parent=1 // pred_region
      _
    $region9: #{tpu_custom_call.1} parent=1 // pred_fallthru
      _
    %v12 = vld [vmem:[%s0] sm:$0x1]
    %v13 = vld [vmem:[%s0 + $0x1] sm:$0x1]
    %v14 = vld [vmem:[%s0 + $0x2] sm:$0x1]
    %v15 = vld [vmem:[%s1] sm:$0xff]
    %v16 = vld [vmem:[%s1 + $0x8] sm:$0xff]
    %v17 = vld [vmem:[%s1 + $0x10] sm:$0xff]
    %v18 = vld [vmem:[%s1 + $0x18] sm:$0xff]
    %v19 = vld [vmem:[%s1 + $0x20] sm:$0xff]
    %v20 = vld [vmem:[%s1 + $0x28] sm:$0xff]
    %v21 = vld [vmem:[%s1 + $0x30] sm:$0xff]
    %v22 = vld [vmem:[%s1 + $0x38] sm:$0xff]
    %v23 = vld [vmem:[%s1 + $0x40] sm:$0xff]
    %v24 = vld [vmem:[%s1 + $0x48] sm:$0xff]
    %v25 = vld [vmem:[%s1 + $0x50] sm:$0xff]
    %v26 = vld [vmem:[%s1 + $0x58] sm:$0xff]
    %v27 = vld [vmem:[%s1 + $0x60] sm:$0xff]
    %v28 = vld [vmem:[%s1 + $0x68] sm:$0xff]
    %v29 = vld [vmem:[%s1 + $0x70] sm:$0xff]
    %v30 = vld [vmem:[%s1 + $0x78] sm:$0xff]
    %v31 = vlaneseq
    %v32 = vand.u32 %v31, 127
    %vm33 = vcmp.lt.s32.totalorder %v32, 8
    %v34 = vsel %vm33, %v12, -inf
    %vm35 = vcmask 1040384
    %v36 = vsel %vm35, %v34, -inf
    %37 = vmax.xlane.f32.xlu0 %v36
    %v38 = vpop.xlane.xlu0 %37
    %vm39 = vcmp.eq.f32.partialorder %v14, 1.0
    %v40 = vsel %vm39, 1.0, 0.5
    %vm41 = vcmp.eq.f32.partialorder %v15, 1.0
    %vm42 = vcmp.eq.f32.partialorder %v16, 1.0
    %vm43 = vcmp.eq.f32.partialorder %v17, 1.0
    %vm44 = vcmp.eq.f32.partialorder %v18, 1.0
    %vm45 = vcmp.eq.f32.partialorder %v19, 1.0
    %vm46 = vcmp.eq.f32.partialorder %v20, 1.0
    %vm47 = vcmp.eq.f32.partialorder %v21, 1.0
    %vm48 = vcmp.eq.f32.partialorder %v22, 1.0
    %vm49 = vcmp.eq.f32.partialorder %v23, 1.0
    %vm50 = vcmp.eq.f32.partialorder %v24, 1.0
    %vm51 = vcmp.eq.f32.partialorder %v25, 1.0
    %vm52 = vcmp.eq.f32.partialorder %v26, 1.0
    %vm53 = vcmp.eq.f32.partialorder %v27, 1.0
    %vm54 = vcmp.eq.f32.partialorder %v28, 1.0
    %vm55 = vcmp.eq.f32.partialorder %v29, 1.0
    %vm56 = vcmp.eq.f32.partialorder %v30, 1.0
    %v57 = vsel %vm41, 1.0, 0.5
    %v58 = vsel %vm42, 1.0, 0.5
    %v59 = vsel %vm43, 1.0, 0.5
    %v60 = vsel %vm44, 1.0, 0.5
    %v61 = vsel %vm45, 1.0, 0.5
    %v62 = vsel %vm46, 1.0, 0.5
    %v63 = vsel %vm47, 1.0, 0.5
    %v64 = vsel %vm48, 1.0, 0.5
    %v65 = vsel %vm49, 1.0, 0.5
    %v66 = vsel %vm50, 1.0, 0.5
    %v67 = vsel %vm51, 1.0, 0.5
    %v68 = vsel %vm52, 1.0, 0.5
    %v69 = vsel %vm53, 1.0, 0.5
    %v70 = vsel %vm54, 1.0, 0.5
    %v71 = vsel %vm55, 1.0, 0.5
    %v72 = vsel %vm56, 1.0, 0.5
    %v73 = vsel %vm39, 1.0, 0.0
    %v74 = vsub.f32 %v38, %v12
    %v75 = vmul.f32 %v74, 1.442695
    %v76 = vpow.pop %v75
    %v77 = vmul.f32 %v76, %v40
    %v78 = vsel %vm39, %v77, 0.0
    %v79 = vlaneseq
    %v80 = vshrl.u32 %v79, 7
    %v81 = vsub.s32 0, %v80
    %v82 = vrot.slane %v38, %v81
    %v83 = vsub.f32 %v15, %v82
    %v84 = vsub.f32 %v16, %v82
    %v85 = vsub.f32 %v17, %v82
    %v86 = vsub.f32 %v18, %v82
    %v87 = vsub.f32 %v19, %v82
    %v88 = vsub.f32 %v20, %v82
    %v89 = vsub.f32 %v21, %v82
    %v90 = vsub.f32 %v22, %v82
    %v91 = vsub.f32 %v23, %v82
    %v92 = vsub.f32 %v24, %v82
    %v93 = vsub.f32 %v25, %v82
    %v94 = vsub.f32 %v26, %v82
    %v95 = vsub.f32 %v27, %v82
    %v96 = vsub.f32 %v28, %v82
    %v97 = vsub.f32 %v29, %v82
    %v98 = vsub.f32 %v30, %v82
    %v99 = vmul.f32 %v83, 1.442695
    %v100 = vpow.pop %v99
    %v101 = vmul.f32 %v84, 1.442695
    %v102 = vpow.pop %v101
    %v103 = vmul.f32 %v85, 1.442695
    %v104 = vpow.pop %v103
    %v105 = vmul.f32 %v86, 1.442695
    %v106 = vpow.pop %v105
    %v107 = vmul.f32 %v87, 1.442695
    %v108 = vpow.pop %v107
    %v109 = vmul.f32 %v88, 1.442695
    %v110 = vpow.pop %v109
    %v111 = vmul.f32 %v89, 1.442695
    %v112 = vpow.pop %v111
    %v113 = vmul.f32 %v90, 1.442695
    %v114 = vpow.pop %v113
    %v115 = vmul.f32 %v91, 1.442695
    %v116 = vpow.pop %v115
    %v117 = vmul.f32 %v92, 1.442695
    %v118 = vpow.pop %v117
    %v119 = vmul.f32 %v93, 1.442695
    %v120 = vpow.pop %v119
    %v121 = vmul.f32 %v94, 1.442695
    %v122 = vpow.pop %v121
    %v123 = vmul.f32 %v95, 1.442695
    %v124 = vpow.pop %v123
    %v125 = vmul.f32 %v96, 1.442695
    %v126 = vpow.pop %v125
    %v127 = vmul.f32 %v97, 1.442695
    %v128 = vpow.pop %v127
    %v129 = vmul.f32 %v98, 1.442695
    %v130 = vpow.pop %v129
    %147 = vrot.lane.b32.xlu0 %v57, 126
    %v148 = vpop.permute.xlu0 %147
    %149 = vrot.lane.b32.xlu0 %v58, 126
    %v150 = vpop.permute.xlu0 %149
    %151 = vrot.lane.b32.xlu0 %v59, 126
    %v152 = vpop.permute.xlu0 %151
    %153 = vrot.lane.b32.xlu0 %v60, 126
    %v154 = vpop.permute.xlu0 %153
    %155 = vrot.lane.b32.xlu0 %v61, 126
    %v156 = vpop.permute.xlu0 %155
    %157 = vrot.lane.b32.xlu0 %v62, 126
    %v158 = vpop.permute.xlu0 %157
    %159 = vrot.lane.b32.xlu0 %v63, 126
    %v160 = vpop.permute.xlu0 %159
    %161 = vrot.lane.b32.xlu0 %v64, 126
    %v162 = vpop.permute.xlu0 %161
    %163 = vrot.lane.b32.xlu0 %v65, 126
    %v164 = vpop.permute.xlu0 %163
    %165 = vrot.lane.b32.xlu0 %v66, 126
    %v166 = vpop.permute.xlu0 %165
    %167 = vrot.lane.b32.xlu0 %v67, 126
    %v168 = vpop.permute.xlu0 %167
    %169 = vrot.lane.b32.xlu0 %v68, 126
    %v170 = vpop.permute.xlu0 %169
    %171 = vrot.lane.b32.xlu0 %v69, 126
    %v172 = vpop.permute.xlu0 %171
    %173 = vrot.lane.b32.xlu0 %v70, 126
    %v174 = vpop.permute.xlu0 %173
    %175 = vrot.lane.b32.xlu0 %v71, 126
    %v176 = vpop.permute.xlu0 %175
    %177 = vrot.lane.b32.xlu0 %v72, 126
    %v178 = vpop.permute.xlu0 %177
    %v195 = vmul.f32 %v100, %v148
    %v196 = vmul.f32 %v102, %v150
    %v197 = vmul.f32 %v104, %v152
    %v198 = vmul.f32 %v106, %v154
    %v199 = vmul.f32 %v108, %v156
    %v200 = vmul.f32 %v110, %v158
    %v201 = vmul.f32 %v112, %v160
    %v202 = vmul.f32 %v114, %v162
    %v203 = vmul.f32 %v116, %v164
    %v204 = vmul.f32 %v118, %v166
    %v205 = vmul.f32 %v120, %v168
    %v206 = vmul.f32 %v122, %v170
    %v207 = vmul.f32 %v124, %v172
    %v208 = vmul.f32 %v126, %v174
    %v209 = vmul.f32 %v128, %v176
    %v210 = vmul.f32 %v130, %v178
    %v211 = vlaneseq
    %v212 = vshrl.u32 %v211, 7
    %v213 = vsub.s32 0, %v212
    %v214 = vrot.slane %v13, %v213
    %216 = vset.pattern.permute.xlu0 1
    %217 = vperm.xlu0 %216, %v15
    %v218 = vpop.permute.xlu0 %217
    %221 = vset.pattern.permute.xlu0 1
    %222 = vperm.xlu0 %221, %v16
    %v223 = vpop.permute.xlu0 %222
    %226 = vset.pattern.permute.xlu0 1
    %227 = vperm.xlu0 %226, %v17
    %v228 = vpop.permute.xlu0 %227
    %231 = vset.pattern.permute.xlu0 1
    %232 = vperm.xlu0 %231, %v18
    %v233 = vpop.permute.xlu0 %232
    %236 = vset.pattern.permute.xlu0 1
    %237 = vperm.xlu0 %236, %v19
    %v238 = vpop.permute.xlu0 %237
    %241 = vset.pattern.permute.xlu0 1
    %242 = vperm.xlu0 %241, %v20
    %v243 = vpop.permute.xlu0 %242
    %246 = vset.pattern.permute.xlu0 1
    %247 = vperm.xlu0 %246, %v21
    %v248 = vpop.permute.xlu0 %247
    %251 = vset.pattern.permute.xlu0 1
    %252 = vperm.xlu0 %251, %v22
    %v253 = vpop.permute.xlu0 %252
    %256 = vset.pattern.permute.xlu0 1
    %257 = vperm.xlu0 %256, %v23
    %v258 = vpop.permute.xlu0 %257
    %261 = vset.pattern.permute.xlu0 1
    %262 = vperm.xlu0 %261, %v24
    %v263 = vpop.permute.xlu0 %262
    %266 = vset.pattern.permute.xlu0 1
    %267 = vperm.xlu0 %266, %v25
    %v268 = vpop.permute.xlu0 %267
    %271 = vset.pattern.permute.xlu0 1
    %272 = vperm.xlu0 %271, %v26
    %v273 = vpop.permute.xlu0 %272
    %276 = vset.pattern.permute.xlu0 1
    %277 = vperm.xlu0 %276, %v27
    %v278 = vpop.permute.xlu0 %277
    %281 = vset.pattern.permute.xlu0 1
    %282 = vperm.xlu0 %281, %v28
    %v283 = vpop.permute.xlu0 %282
    %286 = vset.pattern.permute.xlu0 1
    %287 = vperm.xlu0 %286, %v29
    %v288 = vpop.permute.xlu0 %287
    %291 = vset.pattern.permute.xlu0 1
    %292 = vperm.xlu0 %291, %v30
    %v293 = vpop.permute.xlu0 %292
    %vm295 = vcmp.lt.f32.partialorder %v214, %v218
    %vm296 = vcmp.lt.f32.partialorder %v214, %v223
    %vm297 = vcmp.lt.f32.partialorder %v214, %v228
    %vm298 = vcmp.lt.f32.partialorder %v214, %v233
    %vm299 = vcmp.lt.f32.partialorder %v214, %v238
    %vm300 = vcmp.lt.f32.partialorder %v214, %v243
    %vm301 = vcmp.lt.f32.partialorder %v214, %v248
    %vm302 = vcmp.lt.f32.partialorder %v214, %v253
    %vm303 = vcmp.lt.f32.partialorder %v214, %v258
    %vm304 = vcmp.lt.f32.partialorder %v214, %v263
    %vm305 = vcmp.lt.f32.partialorder %v214, %v268
    %vm306 = vcmp.lt.f32.partialorder %v214, %v273
    %vm307 = vcmp.lt.f32.partialorder %v214, %v278
    %vm308 = vcmp.lt.f32.partialorder %v214, %v283
    %vm309 = vcmp.lt.f32.partialorder %v214, %v288
    %vm310 = vcmp.lt.f32.partialorder %v214, %v293
    %v311 = vlaneseq
    %v312 = vshrl.u32 %v311, 7
    %v313 = vsub.s32 0, %v312
    %v314 = vrot.slane %v78, %v313
    %316 = vset.pattern.permute.xlu0 0
    %317 = vperm.xlu0 %316, %v195
    %v318 = vpop.permute.xlu0 %317
    %321 = vset.pattern.permute.xlu0 0
    %322 = vperm.xlu0 %321, %v196
    %v323 = vpop.permute.xlu0 %322
    %326 = vset.pattern.permute.xlu0 0
    %327 = vperm.xlu0 %326, %v197
    %v328 = vpop.permute.xlu0 %327
    %331 = vset.pattern.permute.xlu0 0
    %332 = vperm.xlu0 %331, %v198
    %v333 = vpop.permute.xlu0 %332
    %336 = vset.pattern.permute.xlu0 0
    %337 = vperm.xlu0 %336, %v199
    %v338 = vpop.permute.xlu0 %337
    %341 = vset.pattern.permute.xlu0 0
    %342 = vperm.xlu0 %341, %v200
    %v343 = vpop.permute.xlu0 %342
    %346 = vset.pattern.permute.xlu0 0
    %347 = vperm.xlu0 %346, %v201
    %v348 = vpop.permute.xlu0 %347
    %351 = vset.pattern.permute.xlu0 0
    %352 = vperm.xlu0 %351, %v202
    %v353 = vpop.permute.xlu0 %352
    %356 = vset.pattern.permute.xlu0 0
    %357 = vperm.xlu0 %356, %v203
    %v358 = vpop.permute.xlu0 %357
    %361 = vset.pattern.permute.xlu0 0
    %362 = vperm.xlu0 %361, %v204
    %v363 = vpop.permute.xlu0 %362
    %366 = vset.pattern.permute.xlu0 0
    %367 = vperm.xlu0 %366, %v205
    %v368 = vpop.permute.xlu0 %367
    %371 = vset.pattern.permute.xlu0 0
    %372 = vperm.xlu0 %371, %v206
    %v373 = vpop.permute.xlu0 %372
    %376 = vset.pattern.permute.xlu0 0
    %377 = vperm.xlu0 %376, %v207
    %v378 = vpop.permute.xlu0 %377
    %381 = vset.pattern.permute.xlu0 0
    %382 = vperm.xlu0 %381, %v208
    %v383 = vpop.permute.xlu0 %382
    %386 = vset.pattern.permute.xlu0 0
    %387 = vperm.xlu0 %386, %v209
    %v388 = vpop.permute.xlu0 %387
    %391 = vset.pattern.permute.xlu0 0
    %392 = vperm.xlu0 %391, %v210
    %v393 = vpop.permute.xlu0 %392
    %v395 = vmul.f32 %v314, %v318
    %v396 = vmul.f32 %v314, %v323
    %v397 = vmul.f32 %v314, %v328
    %v398 = vmul.f32 %v314, %v333
    %v399 = vmul.f32 %v314, %v338
    %v400 = vmul.f32 %v314, %v343
    %v401 = vmul.f32 %v314, %v348
    %v402 = vmul.f32 %v314, %v353
    %v403 = vmul.f32 %v314, %v358
    %v404 = vmul.f32 %v314, %v363
    %v405 = vmul.f32 %v314, %v368
    %v406 = vmul.f32 %v314, %v373
    %v407 = vmul.f32 %v314, %v378
    %v408 = vmul.f32 %v314, %v383
    %v409 = vmul.f32 %v314, %v388
    %v410 = vmul.f32 %v314, %v393
    %v411 = vsel %vm295, %v395, 0.0
    %v412 = vsel %vm296, %v396, 0.0
    %v413 = vsel %vm297, %v397, 0.0
    %v414 = vsel %vm298, %v398, 0.0
    %v415 = vsel %vm299, %v399, 0.0
    %v416 = vsel %vm300, %v400, 0.0
    %v417 = vsel %vm301, %v401, 0.0
    %v418 = vsel %vm302, %v402, 0.0
    %v419 = vsel %vm303, %v403, 0.0
    %v420 = vsel %vm304, %v404, 0.0
    %v421 = vsel %vm305, %v405, 0.0
    %v422 = vsel %vm306, %v406, 0.0
    %v423 = vsel %vm307, %v407, 0.0
    %v424 = vsel %vm308, %v408, 0.0
    %v425 = vsel %vm309, %v409, 0.0
    %v426 = vsel %vm310, %v410, 0.0
    %v427 = vlaneseq
    %v428 = vshrl.u32 %v427, 7
    %v429 = vsub.s32 0, %v428
    %v430 = vrot.slane %v73, %v429
    %v431 = vsel %vm295, %v430, 0.0
    %v432 = vsel %vm296, %v430, 0.0
    %v433 = vsel %vm297, %v430, 0.0
    %v434 = vsel %vm298, %v430, 0.0
    %v435 = vsel %vm299, %v430, 0.0
    %v436 = vsel %vm300, %v430, 0.0
    %v437 = vsel %vm301, %v430, 0.0
    %v438 = vsel %vm302, %v430, 0.0
    %v439 = vsel %vm303, %v430, 0.0
    %v440 = vsel %vm304, %v430, 0.0
    %v441 = vsel %vm305, %v430, 0.0
    %v442 = vsel %vm306, %v430, 0.0
    %v443 = vsel %vm307, %v430, 0.0
    %v444 = vsel %vm308, %v430, 0.0
    %v445 = vsel %vm309, %v430, 0.0
    %v446 = vsel %vm310, %v430, 0.0
    %v447 = vadd.f32 %v411, %v412
    %v448 = vadd.f32 %v447, %v413
    %v449 = vadd.f32 %v448, %v414
    %v450 = vadd.f32 %v449, %v415
    %v451 = vadd.f32 %v450, %v416
    %v452 = vadd.f32 %v451, %v417
    %v453 = vadd.f32 %v452, %v418
    %v454 = vadd.f32 %v453, %v419
    %v455 = vadd.f32 %v454, %v420
    %v456 = vadd.f32 %v455, %v421
    %v457 = vadd.f32 %v456, %v422
    %v458 = vadd.f32 %v457, %v423
    %v459 = vadd.f32 %v458, %v424
    %v460 = vadd.f32 %v459, %v425
    %v461 = vadd.f32 %v460, %v426
    %462 = vadd.xlane.f32.xlu0 %v461
    %v463 = vpop.xlane.xlu0 %462
    %v464 = vrot.slane %v463, 4
    %v465 = vadd.f32 %v463, %v464
    %v466 = vrot.slane %v465, 2
    %v467 = vadd.f32 %v465, %v466
    %v468 = vrot.slane %v467, 1
    %v469 = vadd.f32 %v467, %v468
    %s470 = vtos %v469
    %s471 = scalar_lea.smem [#allocation2], 0
    %472 = sst [smem:[%s471]] %s470
    %v473 = vadd.f32 %v431, %v432
    %v474 = vadd.f32 %v473, %v433
    %v475 = vadd.f32 %v474, %v434
    %v476 = vadd.f32 %v475, %v435
    %v477 = vadd.f32 %v476, %v436
    %v478 = vadd.f32 %v477, %v437
    %v479 = vadd.f32 %v478, %v438
    %v480 = vadd.f32 %v479, %v439
    %v481 = vadd.f32 %v480, %v440
    %v482 = vadd.f32 %v481, %v441
    %v483 = vadd.f32 %v482, %v442
    %v484 = vadd.f32 %v483, %v443
    %v485 = vadd.f32 %v484, %v444
    %v486 = vadd.f32 %v485, %v445
    %v487 = vadd.f32 %v486, %v446
    %488 = vadd.xlane.f32.xlu0 %v487
    %v489 = vpop.xlane.xlu0 %488
    %v490 = vrot.slane %v489, 4
    %v491 = vadd.f32 %v489, %v490
    %v492 = vrot.slane %v491, 2
    %v493 = vadd.f32 %v491, %v492
    %v494 = vrot.slane %v493, 1
    %v495 = vadd.f32 %v493, %v494
    %s496 = vtos %v495
    %s497 = scalar_lea.smem [#allocation2], 1
    %498 = sst [smem:[%s497]] %s496
    // Predicated region
    $region10: #{tpu_custom_call.1} parent=1 // pred_check
      _
    $region11: #{tpu_custom_call.1} parent=1 // pred_check_branch
      %500 = sbr.rel (0) target = $region13
    $region12: #{tpu_custom_call.1} parent=1 // pred_region
      %s502 = ssub.s32 16, 16
      %503 = vsyncadd [#allocation3], %s502
      %506 = dma.smem_to_hbm [#allocation2], 16, %s2, [#allocation3]
    $region13: #{tpu_custom_call.1} parent=1 // pred_fallthru
      _
    // Predicated region
    $region14: #{tpu_custom_call.1} parent=1 // pred_check
      _
    $region15: #{tpu_custom_call.1} parent=1 // pred_check_branch
      %508 = sbr.rel (0) target = $region17
    $region16: #{tpu_custom_call.1} parent=1 // pred_region
      %509 = dma.done [#allocation3], 16
    $region17: #{tpu_custom_call.1} parent=1 // pred_fallthru
      _
    %510 = sfence
    %511 = vsyncpa [#allocation3], 1

</llo_original>
